<compile_context>
chip_gen: v5e
topology: v5e:2x2
jax: 0.10.0
libtpu: 0.0.40
codegen_flags: <defaults>
</compile_context>

<pallas_src>
import math
import functools

import jax
import jax.numpy as jnp
from jax.experimental import pallas as pl
from jax.experimental.pallas import tpu as pltpu


def _gelu_erf(x):
    # exact-erf gelu, matching the PyTorch reference gelu()
    return x * 0.5 * (1.0 + jax.lax.erf(x / math.sqrt(2.0)))


def _pick_tile(total, max_tile, align):
    """Largest aligned divisor of `total` that is <= max_tile (or `total` itself)."""
    if total <= max_tile:
        return total
    t = (max_tile // align) * align
    while t >= align:
        if total % t == 0:
            return t
        t -= align
    return total  # fallback: no tiling along this axis


def _make_kernel(compute_dtype, eps, inv_h):
    def kernel(x_ref, w1_ref, b1_ref, w2_ref, b2_ref, g_ref, beta_ref,
               o_ref, acc_ref):
        k = pl.program_id(1)

        @pl.when(k == 0)
        def _():
            acc_ref[...] = jnp.zeros_like(acc_ref)

        x_f32 = x_ref[...].astype(jnp.float32)            # [TM, H] (residual + LN)
        x_mm = x_f32.astype(compute_dtype)                 # matmul operand dtype

        # dense_1 chunk: [TM, H] @ [H, TK] -> [TM, TK], bias + gelu in f32
        h = jnp.dot(x_mm, w1_ref[...], preferred_element_type=jnp.float32)
        h = _gelu_erf(h + b1_ref[...])

        # dense_2 chunk: [TM, TK] @ [TK, H] accumulated into f32 scratch
        acc_ref[...] += jnp.dot(h.astype(compute_dtype), w2_ref[...],
                                preferred_element_type=jnp.float32)

        @pl.when(k == pl.num_programs(1) - 1)
        def _():
            # TODO(synk): dropout is identity here (eval mode).
            # bias + residual added exactly once, then TF-style LayerNorm.
            y = acc_ref[...] + b2_ref[...] + x_f32
            u = jnp.sum(y, axis=-1, keepdims=True) * inv_h
            d = y - u
            s = jnp.sum(d * d, axis=-1, keepdims=True) * inv_h
            y = d * jax.lax.rsqrt(s + eps)
            y = g_ref[...] * y + beta_ref[...]
            o_ref[...] = y.astype(o_ref.dtype)

    return kernel


@functools.partial(jax.jit, static_argnames=("matmul_dtype", "tm_max", "tk_max"))
def intermediate_forward(x, w1, b1, w2, b2, gamma, beta, *,
                         matmul_dtype=None, tm_max=256, tk_max=1024):
    """x: [B, S, H]; weights stored as [in, out] (= torch weight.T); returns [B, S, H]."""
    B, S, H = x.shape
    H4 = w1.shape[1]
    M = B * S
    eps = 1e-12

    compute_dtype = jnp.dtype(matmul_dtype) if matmul_dtype is not None else jnp.dtype(x.dtype)

    # Tile sizes: TM rows per step (multiple of 8), TK chunk of the 4H dim
    # (multiple of 128) -- lane-dense, MXU-aligned when shapes allow.
    TM = _pick_tile(M, tm_max, 8)
    TK = _pick_tile(H4, tk_max, 128)
    grid = (M // TM, H4 // TK)

    x2 = x.reshape(M, H)
    w1c = w1.astype(compute_dtype)          # halves HBM/DMA bytes when bf16
    w2c = w2.astype(compute_dtype)
    b1_2 = b1.reshape(1, H4).astype(jnp.float32)
    b2_2 = b2.reshape(1, H).astype(jnp.float32)
    g_2 = gamma.reshape(1, H).astype(jnp.float32)
    be_2 = beta.reshape(1, H).astype(jnp.float32)

    kernel = _make_kernel(compute_dtype, eps, 1.0 / H)

    out = pl.pallas_call(
        kernel,
        out_shape=jax.ShapeDtypeStruct((M, H), x.dtype),
        grid_spec=pltpu.PrefetchScalarGridSpec(
            num_scalar_prefetch=0,
            grid=grid,
            in_specs=[
                pl.BlockSpec((TM, H), lambda m, k: (m, 0)),   # x tile (resident over k)
                pl.BlockSpec((H, TK), lambda m, k: (0, k)),   # W1 k-chunk
                pl.BlockSpec((1, TK), lambda m, k: (0, k)),   # b1 k-chunk
                pl.BlockSpec((TK, H), lambda m, k: (k, 0)),   # W2 k-chunk
                pl.BlockSpec((1, H), lambda m, k: (0, 0)),    # b2
                pl.BlockSpec((1, H), lambda m, k: (0, 0)),    # gamma
                pl.BlockSpec((1, H), lambda m, k: (0, 0)),    # beta
            ],
            out_specs=pl.BlockSpec((TM, H), lambda m, k: (m, 0)),
            scratch_shapes=[pltpu.VMEM((TM, H), jnp.float32)],
        ),
        compiler_params=pltpu.CompilerParams(
            dimension_semantics=("parallel", "arbitrary"),
            vmem_limit_bytes=48 * 1024 * 1024,   # fits v7x's 64 MiB with headroom
        ),
    )(x2, w1c, b1_2, w2c, b2_2, g_2, be_2)
    return out.reshape(B, S, H)


if __name__ == "__main__":
    # small, deterministic config: batch=2, seq=8, hidden=32 (intermediate=128)
    B, S, H = 2, 8, 32
    H4 = 4 * H

    key = jax.random.PRNGKey(0)
    k_x, k_w1, k_b1, k_w2, k_b2 = jax.random.split(key, 5)

    x = jax.random.normal(k_x, (B, S, H), dtype=jnp.float32)
    # deterministic "Linear" params; stored as [in, out] (= torch weight.T)
    w1 = jax.random.normal(k_w1, (H, H4), dtype=jnp.float32) * 0.02
    b1 = jax.random.normal(k_b1, (H4,), dtype=jnp.float32) * 0.02
    w2 = jax.random.normal(k_w2, (H4, H), dtype=jnp.float32) * 0.02
    b2 = jax.random.normal(k_b2, (H,), dtype=jnp.float32) * 0.02
    gamma = jnp.ones((H,), dtype=jnp.float32)
    beta = jnp.zeros((H,), dtype=jnp.float32)

    # reference in plain JAX
    def ref(x):
        h = _gelu_erf(x @ w1 + b1)
        h = h @ w2 + b2
        y = h + x
        u = y.mean(-1, keepdims=True)
        s = ((y - u) ** 2).mean(-1, keepdims=True)
        y = (y - u) / jnp.sqrt(s + 1e-12)
        return gamma * y + beta

    ref_out = ref(x)

    # f32 matmul path: exact check
    out = intermediate_forward(x, w1, b1, w2, b2, gamma, beta)
    jax.block_until_ready(out)
    assert out.shape == (B, S, H)
    assert jnp.allclose(out, ref_out, atol=1e-5, rtol=1e-5), (
        float(jnp.max(jnp.abs(out - ref_out))))

    # bf16 matmul-operand path (f32 accumulation + f32 epilogue): loose check
    out_bf16 = intermediate_forward(x, w1, b1, w2, b2, gamma, beta,
                                    matmul_dtype=jnp.bfloat16)
    jax.block_until_ready(out_bf16)
    assert jnp.allclose(out_bf16, ref_out, atol=5e-2, rtol=5e-2), (
        float(jnp.max(jnp.abs(out_bf16 - ref_out))))

    print("KERNEL_OK")
</pallas_src>

<mosaic_0001>
module attributes {stable_mosaic.version = 11 : i64} {
  func.func @kernel(%arg0: i32, %arg1: i32, %arg2: memref<16x32xf32, #tpu.memory_space<vmem>>, %arg3: memref<32x128xf32, #tpu.memory_space<vmem>>, %arg4: memref<1x128xf32, #tpu.memory_space<vmem>>, %arg5: memref<128x32xf32, #tpu.memory_space<vmem>>, %arg6: memref<1x32xf32, #tpu.memory_space<vmem>>, %arg7: memref<1x32xf32, #tpu.memory_space<vmem>>, %arg8: memref<1x32xf32, #tpu.memory_space<vmem>>, %arg9: memref<16x32xf32, #tpu.memory_space<vmem>>, %arg10: memref<16x32xf32, #tpu.memory_space<vmem>>) attributes {dimension_semantics = [#tpu.dimension_semantics<parallel>, #tpu.dimension_semantics<arbitrary>], iteration_bounds = array<i64: 1, 1>, scalar_prefetch = 0 : i64, scratch_operands = 1 : i64, tpu.core_type = #tpu.core_type<tc>, window_params = [{transform_indices = @transform_0, window_bounds = array<i64: 16, 32>}, {transform_indices = @transform_1, window_bounds = array<i64: 32, 128>}, {transform_indices = @transform_2, window_bounds = array<i64: 1, 128>}, {transform_indices = @transform_3, window_bounds = array<i64: 128, 32>}, {pipeline_mode = #tpu.pipeline_mode<synchronous>, transform_indices = @transform_4, window_bounds = array<i64: 1, 32>}, {pipeline_mode = #tpu.pipeline_mode<synchronous>, transform_indices = @transform_5, window_bounds = array<i64: 1, 32>}, {pipeline_mode = #tpu.pipeline_mode<synchronous>, transform_indices = @transform_6, window_bounds = array<i64: 1, 32>}, {transform_indices = @transform_7, window_bounds = array<i64: 16, 32>}]} {
    %c0_i32 = arith.constant 0 : i32
    %0 = arith.cmpi eq, %arg1, %c0_i32 : i32
    %1 = arith.extui %0 : i1 to i32
    %c0_i32_0 = arith.constant 0 : i32
    %2 = arith.cmpi ne, %1, %c0_i32_0 : i32
    scf.if %2 {
      %cst_18 = arith.constant 0.000000e+00 : f32
      %25 = vector.broadcast %cst_18 : f32 to vector<16x32xf32>
      %c0_19 = arith.constant 0 : index
      %c0_20 = arith.constant 0 : index
      %26 = vector.load %arg10[%c0_19, %c0_20] : memref<16x32xf32, #tpu.memory_space<vmem>>, vector<16x32xf32>
      tpu.vector_store %arg10[%c0_19, %c0_20], %25 {strides = array<i32>} : memref<16x32xf32, #tpu.memory_space<vmem>>, vector<16x32xf32>,
    } else {
    }
    %c0 = arith.constant 0 : index
    %c0_1 = arith.constant 0 : index
    %3 = vector.load %arg2[%c0, %c0_1] : memref<16x32xf32, #tpu.memory_space<vmem>>, vector<16x32xf32>
    %c0_2 = arith.constant 0 : index
    %c0_3 = arith.constant 0 : index
    %4 = vector.load %arg3[%c0_2, %c0_3] : memref<32x128xf32, #tpu.memory_space<vmem>>, vector<32x128xf32>
    %cst = arith.constant dense<0.000000e+00> : vector<16x128xf32>
    %5 = tpu.matmul %3, %4, %cst {dimension_numbers = #tpu.dot_dimension_numbers<[1], [0], [0], [1], [0, 0, 1, 1], [], []>} : vector<16x32xf32>, vector<32x128xf32>, vector<16x128xf32> -> vector<16x128xf32>
    %c0_4 = arith.constant 0 : index
    %c0_5 = arith.constant 0 : index
    %6 = vector.load %arg4[%c0_4, %c0_5] : memref<1x128xf32, #tpu.memory_space<vmem>>, vector<1x128xf32>
    %7 = vector.broadcast %6 : vector<1x128xf32> to vector<16x128xf32>
    %8 = arith.addf %5, %7 : vector<16x128xf32>
    %cst_6 = arith.constant 5.000000e-01 : f32
    %9 = vector.broadcast %cst_6 : f32 to vector<16x128xf32>
    %10 = arith.mulf %8, %9 : vector<16x128xf32>
    %cst_7 = arith.constant 1.41421354 : f32
    %11 = vector.broadcast %cst_7 : f32 to vector<16x128xf32>
    %12 = arith.divf %8, %11 : vector<16x128xf32>
    %13 = math.erf %12 : vector<16x128xf32>
    %cst_8 = arith.constant 1.000000e+00 : f32
    %14 = vector.broadcast %cst_8 : f32 to vector<16x128xf32>
    %15 = arith.addf %14, %13 : vector<16x128xf32>
    %16 = arith.mulf %10, %15 : vector<16x128xf32>
    %c0_9 = arith.constant 0 : index
    %c0_10 = arith.constant 0 : index
    %17 = vector.load %arg10[%c0_9, %c0_10] : memref<16x32xf32, #tpu.memory_space<vmem>>, vector<16x32xf32>
    %c0_11 = arith.constant 0 : index
    %c0_12 = arith.constant 0 : index
    %18 = vector.load %arg5[%c0_11, %c0_12] : memref<128x32xf32, #tpu.memory_space<vmem>>, vector<128x32xf32>
    %cst_13 = arith.constant dense<0.000000e+00> : vector<16x32xf32>
    %19 = tpu.matmul %16, %18, %cst_13 {dimension_numbers = #tpu.dot_dimension_numbers<[1], [0], [0], [1], [0, 0, 1, 1], [], []>} : vector<16x128xf32>, vector<128x32xf32>, vector<16x32xf32> -> vector<16x32xf32>
    %20 = arith.addf %17, %19 : vector<16x32xf32>
    %c0_14 = arith.constant 0 : index
    %c0_15 = arith.constant 0 : index
    %21 = vector.load %arg10[%c0_14, %c0_15] : memref<16x32xf32, #tpu.memory_space<vmem>>, vector<16x32xf32>
    tpu.vector_store %arg10[%c0_14, %c0_15], %20 {strides = array<i32>} : memref<16x32xf32, #tpu.memory_space<vmem>>, vector<16x32xf32>,
    %c0_i32_16 = arith.constant 0 : i32
    %22 = arith.cmpi eq, %arg1, %c0_i32_16 : i32
    %23 = arith.extui %22 : i1 to i32
    %c0_i32_17 = arith.constant 0 : i32
    %24 = arith.cmpi ne, %23, %c0_i32_17 : i32
    scf.if %24 {
      %c0_18 = arith.constant 0 : index
      %c0_19 = arith.constant 0 : index
      %25 = vector.load %arg10[%c0_18, %c0_19] : memref<16x32xf32, #tpu.memory_space<vmem>>, vector<16x32xf32>
      %c0_20 = arith.constant 0 : index
      %c0_21 = arith.constant 0 : index
      %26 = vector.load %arg6[%c0_20, %c0_21] : memref<1x32xf32, #tpu.memory_space<vmem>>, vector<1x32xf32>
      %27 = vector.broadcast %26 : vector<1x32xf32> to vector<16x32xf32>
      %28 = arith.addf %25, %27 : vector<16x32xf32>
      %29 = arith.addf %28, %3 : vector<16x32xf32>
      %cst_22 = arith.constant dense<0.000000e+00> : vector<16xf32>
      %30 = vector.multi_reduction <add>, %29, %cst_22 [1] : vector<16x32xf32> to vector<16xf32>
      %31 = vector.shape_cast %30 : vector<16xf32> to vector<16x1xf32>
      %cst_23 = arith.constant 3.125000e-02 : f32
      %32 = vector.broadcast %cst_23 : f32 to vector<16x1xf32>
      %33 = arith.mulf %31, %32 : vector<16x1xf32>
      %34 = vector.broadcast %33 : vector<16x1xf32> to vector<16x32xf32>
      %35 = arith.subf %29, %34 : vector<16x32xf32>
      %36 = arith.mulf %35, %35 : vector<16x32xf32>
      %cst_24 = arith.constant dense<0.000000e+00> : vector<16xf32>
      %37 = vector.multi_reduction <add>, %36, %cst_24 [1] : vector<16x32xf32> to vector<16xf32>
      %38 = vector.shape_cast %37 : vector<16xf32> to vector<16x1xf32>
      %cst_25 = arith.constant 3.125000e-02 : f32
      %39 = vector.broadcast %cst_25 : f32 to vector<16x1xf32>
      %40 = arith.mulf %38, %39 : vector<16x1xf32>
      %cst_26 = arith.constant 9.99999996E-13 : f32
      %41 = vector.broadcast %cst_26 : f32 to vector<16x1xf32>
      %42 = arith.addf %40, %41 : vector<16x1xf32>
      %43 = math.rsqrt %42 : vector<16x1xf32>
      %44 = vector.broadcast %43 : vector<16x1xf32> to vector<16x32xf32>
      %45 = arith.mulf %35, %44 : vector<16x32xf32>
      %c0_27 = arith.constant 0 : index
      %c0_28 = arith.constant 0 : index
      %46 = vector.load %arg7[%c0_27, %c0_28] : memref<1x32xf32, #tpu.memory_space<vmem>>, vector<1x32xf32>
      %47 = vector.broadcast %46 : vector<1x32xf32> to vector<16x32xf32>
      %48 = arith.mulf %47, %45 : vector<16x32xf32>
      %c0_29 = arith.constant 0 : index
      %c0_30 = arith.constant 0 : index
      %49 = vector.load %arg8[%c0_29, %c0_30] : memref<1x32xf32, #tpu.memory_space<vmem>>, vector<1x32xf32>
      %50 = vector.broadcast %49 : vector<1x32xf32> to vector<16x32xf32>
      %51 = arith.addf %48, %50 : vector<16x32xf32>
      %c0_31 = arith.constant 0 : index
      %c0_32 = arith.constant 0 : index
      %52 = vector.load %arg9[%c0_31, %c0_32] : memref<16x32xf32, #tpu.memory_space<vmem>>, vector<16x32xf32>
      tpu.vector_store %arg9[%c0_31, %c0_32], %51 {strides = array<i32>} : memref<16x32xf32, #tpu.memory_space<vmem>>, vector<16x32xf32>,
    } else {
    }
    return
  }
  func.func @transform_0(%arg0: i32, %arg1: i32) -> (i32, i32) {
    %c0_i32 = arith.constant 0 : i32
    %c0_i32_0 = arith.constant 0 : i32
    return %arg0, %c0_i32 : i32, i32
  }
  func.func @transform_1(%arg0: i32, %arg1: i32) -> (i32, i32) {
    %c0_i32 = arith.constant 0 : i32
    %c0_i32_0 = arith.constant 0 : i32
    return %c0_i32, %arg1 : i32, i32
  }
  func.func @transform_2(%arg0: i32, %arg1: i32) -> (i32, i32) {
    %c0_i32 = arith.constant 0 : i32
    %c0_i32_0 = arith.constant 0 : i32
    return %c0_i32, %arg1 : i32, i32
  }
  func.func @transform_3(%arg0: i32, %arg1: i32) -> (i32, i32) {
    %c0_i32 = arith.constant 0 : i32
    %c0_i32_0 = arith.constant 0 : i32
    return %arg1, %c0_i32 : i32, i32
  }
  func.func @transform_4(%arg0: i32, %arg1: i32) -> (i32, i32) {
    %c0_i32 = arith.constant 0 : i32
    %c0_i32_0 = arith.constant 0 : i32
    %c0_i32_1 = arith.constant 0 : i32
    return %c0_i32, %c0_i32_0 : i32, i32
  }
  func.func @transform_5(%arg0: i32, %arg1: i32) -> (i32, i32) {
    %c0_i32 = arith.constant 0 : i32
    %c0_i32_0 = arith.constant 0 : i32
    %c0_i32_1 = arith.constant 0 : i32
    return %c0_i32, %c0_i32_0 : i32, i32
  }
  func.func @transform_6(%arg0: i32, %arg1: i32) -> (i32, i32) {
    %c0_i32 = arith.constant 0 : i32
    %c0_i32_0 = arith.constant 0 : i32
    %c0_i32_1 = arith.constant 0 : i32
    return %c0_i32, %c0_i32_0 : i32, i32
  }
  func.func @transform_7(%arg0: i32, %arg1: i32) -> (i32, i32) {
    %c0_i32 = arith.constant 0 : i32
    %c0_i32_0 = arith.constant 0 : i32
    return %arg0, %c0_i32 : i32, i32
  }
}

</mosaic_0001>

<llo_original>
// kernel: intermediate_forward.1
$region0: #{intermediate_forward.1}
  #allocation0 [shape = 'u32[]', space=smem, size = 0x4, offset = 0x4, fixed_abs, tag = 'smem constant byte address 0x4 - core index']
  #allocation1 [shape = 'u32[72,128]{1,0:T(1,128)}', space=vmem, size = 0x9000, scoped, tag = 'internal scratch']
  #allocation2 [shape = 'f32[16,32]{1,0:T(8,128)}', space=vmem, size = 0x2000, scoped, tag = 'scratch operand']
  %s0 = inlined_call_operand.vmem [shape: f32[16,32], index: 0, kind: input, shape index: {}]
  %s1 = inlined_call_operand.vmem [shape: f32[32,128], index: 1, kind: input, shape index: {}]
  %s2 = inlined_call_operand.vmem [shape: f32[1,128], index: 2, kind: input, shape index: {}]
  %s3 = inlined_call_operand.vmem [shape: f32[128,32], index: 3, kind: input, shape index: {}]
  %s4 = inlined_call_operand.vmem [shape: f32[1,32], index: 4, kind: input, shape index: {}]
  %s5 = inlined_call_operand.vmem [shape: f32[1,32], index: 5, kind: input, shape index: {}]
  %s6 = inlined_call_operand.vmem [shape: f32[1,32], index: 6, kind: input, shape index: {}]
  %s7 = inlined_call_operand.hbm [shape: f32[16,32], index: 7, kind: output, shape index: {}]
  %s8 = sld [smem:[#allocation0]]
  $region46: #{intermediate_forward.1} parent=0
    _
  %s10 = ssub.s32 1, %s8
  %s11 = scalar_select 0, %s10, %s8
  $region1: #{intermediate_forward.1} parent=0
    #allocation3 [shape = 'u8[8192]{0}', space=vmem, size = 0x2000, scoped, tag = 'output window, operand 0, single buffered']
    #allocation4 [shape = 's32[1]{0}', space=sflag, size = 0x4, scoped, tag = 'scoped memory for intermediate_forward.1']
    %12 = vsyncpa [#allocation4], 0
    // Predicated region
    $region2: #{intermediate_forward.1} parent=1 // pred_check
      _
    $region3: #{intermediate_forward.1} parent=1 // pred_check_branch
      %14 = sbr.rel (0) target = $region5
    $region4: #{intermediate_forward.1} parent=1 // pred_region
      _
    $region5: #{intermediate_forward.1} parent=1 // pred_fallthru
      _
    // Predicated region
    $region6: #{intermediate_forward.1} parent=1 // pred_check
      _
    $region7: #{intermediate_forward.1} parent=1 // pred_check_branch
      %16 = sbr.rel (0) target = $region9
    $region8: #{intermediate_forward.1} parent=1 // pred_region
      _
    $region9: #{intermediate_forward.1} parent=1 // pred_fallthru
      _
    // Predicated region
    $region10: #{intermediate_forward.1} parent=1 // pred_check
      _
    $region11: #{intermediate_forward.1} parent=1 // pred_check_branch
      %18 = sbr.rel (0) target = $region13
    $region12: #{intermediate_forward.1} parent=1 // pred_region
      _
    $region13: #{intermediate_forward.1} parent=1 // pred_fallthru
      _
    // Predicated region
    $region14: #{intermediate_forward.1} parent=1 // pred_check
      _
    $region15: #{intermediate_forward.1} parent=1 // pred_check_branch
      %20 = sbr.rel (0) target = $region17
    $region16: #{intermediate_forward.1} parent=1 // pred_region
      _
    $region17: #{intermediate_forward.1} parent=1 // pred_fallthru
      _
    // Predicated region
    $region18: #{intermediate_forward.1} parent=1 // pred_check
      _
    $region19: #{intermediate_forward.1} parent=1 // pred_check_branch
      %22 = sbr.rel (0) target = $region21
    $region20: #{intermediate_forward.1} parent=1 // pred_region
      _
    $region21: #{intermediate_forward.1} parent=1 // pred_fallthru
      _
    // Predicated region
    $region22: #{intermediate_forward.1} parent=1 // pred_check
      _
    $region23: #{intermediate_forward.1} parent=1 // pred_check_branch
      %24 = sbr.rel (0) target = $region25
    $region24: #{intermediate_forward.1} parent=1 // pred_region
      _
    $region25: #{intermediate_forward.1} parent=1 // pred_fallthru
      _
    // Predicated region
    $region26: #{intermediate_forward.1} parent=1 // pred_check
      _
    $region27: #{intermediate_forward.1} parent=1 // pred_check_branch
      %26 = sbr.rel (0) target = $region29
    $region28: #{intermediate_forward.1} parent=1 // pred_region
      _
    $region29: #{intermediate_forward.1} parent=1 // pred_fallthru
      _
    %p27 = scmp.eq.s32.totalorder 0, 0
    // Predicated region
    $region30: #{intermediate_forward.1} parent=1 // pred_check
      %p28 = pneg %p27
    $region31: #{intermediate_forward.1} parent=1 // pred_check_branch
      %30 = sbr.rel (%p28) target = $region33
    $region32: #{intermediate_forward.1} parent=1 // pred_region
      %vm31 = vcmask 261120
      %32 = vst.msk [vmem:[#allocation2] sm:$0xff] %vm31, 0.0
      %33 = vst.msk [vmem:[#allocation2 + $0x8] sm:$0xff] %vm31, 0.0
    $region33: #{intermediate_forward.1} parent=1 // pred_fallthru
      _
    %v34 = vld [vmem:[%s0] sm:$0xff]
    %v35 = vld [vmem:[%s0 + $0x8] sm:$0xff]
    %v36 = vld [vmem:[%s1] sm:$0xff]
    %v37 = vld [vmem:[%s1 + $0x8] sm:$0xff]
    %v38 = vld [vmem:[%s1 + $0x10] sm:$0xff]
    %v39 = vld [vmem:[%s1 + $0x18] sm:$0xff]
    %v40 = vld [vmem:[%s2] sm:$0x1]
    %v42 = vperm.slane %v40, 0
    %vm44 = vcmask 261120
    %v46 = vsel %vm44, %v34, 0
    %v49 = vsel %vm44, %v35, 0
    %51 = vmatpush.msra.mxu0 0.0
    %52 = vmatpush.msra.mxu0 0.0
    %53 = vmatpush.msra.mxu0 0.0
    %54 = vmatpush.msra.mxu0 0.0
    %55 = vmatpush.msra.mxu0 0.0
    %56 = vmatpush.msra.mxu0 0.0
    %57 = vmatpush.msra.mxu0 0.0
    %58 = vmatpush.msra.mxu0 0.0
    %59 = vmatpush.msra.mxu0 0.0
    %60 = vmatpush.msra.mxu0 0.0
    %61 = vmatpush.msra.mxu0 0.0
    %62 = vmatpush.msra.mxu0 0.0
    %63 = vmatpush.msra.mxu0 %v39
    %64 = vmatpush.msra.mxu0 %v38
    %65 = vmatpush.msra.mxu0 %v37
    %66 = vmatpush.msra.mxu0 %v36
    %67 = vmatmul.f32.gmra.mxu0 %v46
    %v68 = vpop.f32.mrf.mxu0
    %v69 = vadd.f32 %v42, %v68
    %70 = vmatmul.f32.gmra.mxu0 %v49
    %v71 = vpop.f32.mrf.mxu0
    %v72 = vadd.f32 %v42, %v71
    %73 = vdwg.mxu0
    %v74 = vmul.f32 %v69, 0.5
    %v75 = vmul.f32 %v72, 0.5
    %v76 = vrcp.pop 1.4142135
    %v77 = vmul.f32 1.4142135, %v76
    %v78 = vsub.f32 1.0, %v77
    %v79 = vmul.f32 %v76, %v78
    %v80 = vadd.f32 %v76, %v79
    %vm81 = vweird.f32 %v76
    %v82 = vsel %vm81, %v76, %v80
    %v83 = vmul.f32 %v69, %v82
    %v84 = vmul.f32 %v72, %v82
    %v85 = vmul.f32 %v83, %v83
    %v86 = vmin.f32 16.0, %v85
    %v87 = vmul.f32 %v86, 2.1237322e-06
    %v88 = vadd.f32 %v87, 0.00028619796
    %v89 = vmul.f32 %v86, %v88
    %v90 = vadd.f32 %v89, 0.0036580483
    %v91 = vmul.f32 %v86, %v90
    %v92 = vadd.f32 %v91, 0.05243302
    %v93 = vmul.f32 %v86, %v92
    %v94 = vadd.f32 %v93, 0.18741608
    %v95 = vmul.f32 %v86, %v94
    %v96 = vadd.f32 %v95, 1.1283791
    %v97 = vmul.f32 %v83, %v96
    %v98 = vmul.f32 %v86, 3.8918573e-05
    %v99 = vadd.f32 %v98, 0.001143296
    %v100 = vmul.f32 %v86, %v99
    %v101 = vadd.f32 %v100, 0.014752088
    %v102 = vmul.f32 %v86, %v101
    %v103 = vadd.f32 %v102, 0.112945676
    %v104 = vmul.f32 %v86, %v103
    %v105 = vadd.f32 %v104, 0.4994258
    %v106 = vmul.f32 %v86, %v105
    %v107 = vadd.f32 %v106, 1.0
    %v108 = vrcp.pop %v107
    %v109 = vmul.f32 %v107, %v108
    %v110 = vsub.f32 1.0, %v109
    %v111 = vmul.f32 %v108, %v110
    %v112 = vadd.f32 %v108, %v111
    %vm113 = vweird.f32 %v107
    %vm114 = vweird.f32 %v108
    %vm115 = vmor %vm113, %vm114
    %v116 = vsel %vm115, %v108, %v112
    %v117 = vand.u32 2147483647, %v107
    %vm118 = vcmp.eq.f32.partialorder %v117, 8.507059e+37
    %v119 = vand.u32 %v107, 2147483648
    %v120 = vor.u32 1.1754944e-38, %v119
    %v121 = vsel %vm118, %v120, %v116
    %v122 = vmul.f32 %v97, %v121
    %v123 = vmin.f32 %v122, 1.0
    %v124 = vmax.f32 %v123, -1.0
    %v125 = vmul.f32 %v84, %v84
    %v126 = vmin.f32 16.0, %v125
    %v127 = vmul.f32 %v126, 2.1237322e-06
    %v128 = vadd.f32 %v127, 0.00028619796
    %v129 = vmul.f32 %v126, %v128
    %v130 = vadd.f32 %v129, 0.0036580483
    %v131 = vmul.f32 %v126, %v130
    %v132 = vadd.f32 %v131, 0.05243302
    %v133 = vmul.f32 %v126, %v132
    %v134 = vadd.f32 %v133, 0.18741608
    %v135 = vmul.f32 %v126, %v134
    %v136 = vadd.f32 %v135, 1.1283791
    %v137 = vmul.f32 %v84, %v136
    %v138 = vmul.f32 %v126, 3.8918573e-05
    %v139 = vadd.f32 %v138, 0.001143296
    %v140 = vmul.f32 %v126, %v139
    %v141 = vadd.f32 %v140, 0.014752088
    %v142 = vmul.f32 %v126, %v141
    %v143 = vadd.f32 %v142, 0.112945676
    %v144 = vmul.f32 %v126, %v143
    %v145 = vadd.f32 %v144, 0.4994258
    %v146 = vmul.f32 %v126, %v145
    %v147 = vadd.f32 %v146, 1.0
    %v148 = vrcp.pop %v147
    %v149 = vmul.f32 %v147, %v148
    %v150 = vsub.f32 1.0, %v149
    %v151 = vmul.f32 %v148, %v150
    %v152 = vadd.f32 %v148, %v151
    %vm153 = vweird.f32 %v147
    %vm154 = vweird.f32 %v148
    %vm155 = vmor %vm153, %vm154
    %v156 = vsel %vm155, %v148, %v152
    %v157 = vand.u32 2147483647, %v147
    %vm158 = vcmp.eq.f32.partialorder %v157, 8.507059e+37
    %v159 = vand.u32 %v147, 2147483648
    %v160 = vor.u32 1.1754944e-38, %v159
    %v161 = vsel %vm158, %v160, %v156
    %v162 = vmul.f32 %v137, %v161
    %v163 = vmin.f32 %v162, 1.0
    %v164 = vmax.f32 %v163, -1.0
    %v165 = vadd.f32 %v124, 1.0
    %v166 = vadd.f32 %v164, 1.0
    %v167 = vmul.f32 %v74, %v165
    %v168 = vmul.f32 %v75, %v166
    %v169 = vld [vmem:[#allocation2] sm:$0xff]
    %v170 = vld [vmem:[#allocation2 + $0x8] sm:$0xff]
    %v171 = vld [vmem:[%s3] sm:$0xff]
    %v172 = vld [vmem:[%s3 + $0x8] sm:$0xff]
    %v173 = vld [vmem:[%s3 + $0x10] sm:$0xff]
    %v174 = vld [vmem:[%s3 + $0x18] sm:$0xff]
    %v175 = vld [vmem:[%s3 + $0x20] sm:$0xff]
    %v176 = vld [vmem:[%s3 + $0x28] sm:$0xff]
    %v177 = vld [vmem:[%s3 + $0x30] sm:$0xff]
    %v178 = vld [vmem:[%s3 + $0x38] sm:$0xff]
    %v179 = vld [vmem:[%s3 + $0x40] sm:$0xff]
    %v180 = vld [vmem:[%s3 + $0x48] sm:$0xff]
    %v181 = vld [vmem:[%s3 + $0x50] sm:$0xff]
    %v182 = vld [vmem:[%s3 + $0x58] sm:$0xff]
    %v183 = vld [vmem:[%s3 + $0x60] sm:$0xff]
    %v184 = vld [vmem:[%s3 + $0x68] sm:$0xff]
    %v185 = vld [vmem:[%s3 + $0x70] sm:$0xff]
    %v186 = vld [vmem:[%s3 + $0x78] sm:$0xff]
    %187 = vmatpush.msra.mxu0 %v186
    %188 = vmatpush.msra.mxu0 %v185
    %189 = vmatpush.msra.mxu0 %v184
    %190 = vmatpush.msra.mxu0 %v183
    %191 = vmatpush.msra.mxu0 %v182
    %192 = vmatpush.msra.mxu0 %v181
    %193 = vmatpush.msra.mxu0 %v180
    %194 = vmatpush.msra.mxu0 %v179
    %195 = vmatpush.msra.mxu0 %v178
    %196 = vmatpush.msra.mxu0 %v177
    %197 = vmatpush.msra.mxu0 %v176
    %198 = vmatpush.msra.mxu0 %v175
    %199 = vmatpush.msra.mxu0 %v174
    %200 = vmatpush.msra.mxu0 %v173
    %201 = vmatpush.msra.mxu0 %v172
    %202 = vmatpush.msra.mxu0 %v171
    %203 = vmatmul.f32.gmra.mxu0 %v167
    %v204 = vpop.f32.mrf.mxu0
    %v205 = vadd.f32 0.0, %v204
    %206 = vmatmul.f32.gmra.mxu0 %v168
    %v207 = vpop.f32.mrf.mxu0
    %v208 = vadd.f32 0.0, %v207
    %209 = vdwg.mxu0
    %v210 = vadd.f32 %v169, %v205
    %v211 = vadd.f32 %v170, %v208
    %212 = vst.msk [vmem:[#allocation2] sm:$0xff] %vm44, %v210
    %213 = vst.msk [vmem:[#allocation2 + $0x8] sm:$0xff] %vm44, %v211
    // Predicated region
    $region34: #{intermediate_forward.1} parent=1 // pred_check
      %p214 = pneg %p27
    $region35: #{intermediate_forward.1} parent=1 // pred_check_branch
      %216 = sbr.rel (%p214) target = $region37
    $region36: #{intermediate_forward.1} parent=1 // pred_region
      %v217 = vld [vmem:[#allocation2] sm:$0xff]
      %v218 = vld [vmem:[#allocation2 + $0x8] sm:$0xff]
      %v219 = vld [vmem:[%s4] sm:$0x1]
      %v221 = vperm.slane %v219, 0
      %v223 = vadd.f32 %v217, %v221
      %v224 = vadd.f32 %v218, %v221
      %v225 = vadd.f32 %v223, %v34
      %v226 = vadd.f32 %v224, %v35
      %v227 = vsel %vm44, %v225, 0.0
      %228 = vadd.xlane.f32.xlu0 %v227
      %v229 = vpop.xlane.xlu0 %228
      %v230 = vsel %vm44, %v226, 0.0
      %231 = vadd.xlane.f32.xlu0 %v230
      %v232 = vpop.xlane.xlu0 %231
      %v233 = vmul.f32 %v229, 0.03125
      %v234 = vmul.f32 %v232, 0.03125
      %v235 = vsub.f32 %v225, %v233
      %v236 = vsub.f32 %v226, %v234
      %v237 = vmul.f32 %v235, %v235
      %v238 = vmul.f32 %v236, %v236
      %v239 = vsel %vm44, %v237, 0.0
      %240 = vadd.xlane.f32.xlu0 %v239
      %v241 = vpop.xlane.xlu0 %240
      %v242 = vsel %vm44, %v238, 0.0
      %243 = vadd.xlane.f32.xlu0 %v242
      %v244 = vpop.xlane.xlu0 %243
      %v245 = vmul.f32 %v241, 0.03125
      %v246 = vmul.f32 %v244, 0.03125
      %v247 = vadd.f32 %v245, 1e-12
      %v248 = vadd.f32 %v246, 1e-12
      %v249 = vrsqrt.pop %v247
      %v250 = vmul.f32 %v249, %v247
      %v251 = vmul.f32 %v250, %v249
      %v252 = vmul.f32 0.5, %v251
      %v253 = vsub.f32 1.5, %v252
      %v254 = vmul.f32 %v249, %v253
      %vm255 = vweird.f32 %v247
      %vm256 = vweird.f32 %v249
      %vm257 = vmor %vm255, %vm256
      %v258 = vsel %vm257, %v249, %v254
      %v259 = vrsqrt.pop %v248
      %v260 = vmul.f32 %v259, %v248
      %v261 = vmul.f32 %v260, %v259
      %v262 = vmul.f32 0.5, %v261
      %v263 = vsub.f32 1.5, %v262
      %v264 = vmul.f32 %v259, %v263
      %vm265 = vweird.f32 %v248
      %vm266 = vweird.f32 %v259
      %vm267 = vmor %vm265, %vm266
      %v268 = vsel %vm267, %v259, %v264
      %v269 = vmul.f32 %v235, %v258
      %v270 = vmul.f32 %v236, %v268
      %v271 = vld [vmem:[%s5] sm:$0x1]
      %v273 = vperm.slane %v271, 0
      %v275 = vmul.f32 %v273, %v269
      %v276 = vmul.f32 %v273, %v270
      %v277 = vld [vmem:[%s6] sm:$0x1]
      %v279 = vperm.slane %v277, 0
      %v281 = vadd.f32 %v275, %v279
      %v282 = vadd.f32 %v276, %v279
      %283 = vst.msk [vmem:[#allocation3] sm:$0xff] %vm44, %v281
      %284 = vst.msk [vmem:[#allocation3 + $0x8] sm:$0xff] %vm44, %v282
    $region37: #{intermediate_forward.1} parent=1 // pred_fallthru
      _
    // Predicated region
    $region38: #{intermediate_forward.1} parent=1 // pred_check
      _
    $region39: #{intermediate_forward.1} parent=1 // pred_check_branch
      %286 = sbr.rel (0) target = $region41
    $region40: #{intermediate_forward.1} parent=1 // pred_region
      %288 = vsyncadd [#allocation4], 0
      %s289 = sshll.u32 [#allocation3], 4
      %s290 = int_to_ptr.vmem [resolvable:$true] %s289
      %s291 = sshll.u32 %s7, 4
      %s292 = int_to_ptr.hbm [resolvable:$true] %s291
      %297 = dma.vmem_to_hbm [thread:$0]  %s290, 256, %s292, [#allocation4], 128, 128, 8
    $region41: #{intermediate_forward.1} parent=1 // pred_fallthru
      _
    // Predicated region
    $region42: #{intermediate_forward.1} parent=1 // pred_check
      _
    $region43: #{intermediate_forward.1} parent=1 // pred_check_branch
      %299 = sbr.rel (0) target = $region45
    $region44: #{intermediate_forward.1} parent=1 // pred_region
      %301 = dma.done [#allocation4], 256
    $region45: #{intermediate_forward.1} parent=1 // pred_fallthru
      _
    %302 = vsyncpa [#allocation4], 1

</llo_original>
